<compile_context>
chip_gen: v5e
topology: v5e:2x2
jax: 0.10.0
libtpu: 0.0.40
codegen_flags: <defaults>
</compile_context>

<pallas_src>
from functools import partial

import jax
import jax.numpy as jnp
from jax.experimental import pallas as pl
from jax.experimental.pallas import tpu as pltpu

F_IN = 5
F_OUT = 2
_LANES = 128
# Max sublane-rows per grid step: 2048 rows * 128 lanes = 262144 batch elements.
# VMEM: 2 buffers * (5 + 2) * 2048 * 128 * 4 B ~= 14 MiB (fits 32 MiB scoped
# default on every generation, including v7x's 64 MiB physical VMEM).
_MAX_TILE_ROWS = 2048


# ---------------------------------------------------------------------------
# GRL: identity forward, grad * (-lam) backward (plain JAX, no kernel needed).
# ---------------------------------------------------------------------------
@partial(jax.custom_vjp, nondiff_argnums=(1,))
def _grad_reverse(x, lam):
    return x


def _grad_reverse_fwd(x, lam):
    return x, None


def _grad_reverse_bwd(lam, _res, g):
    return (-lam * g,)


_grad_reverse.defvjp(_grad_reverse_fwd, _grad_reverse_bwd)


# ---------------------------------------------------------------------------
# Pallas kernel: y^T[j] = b[j] + sum_k w[j, k] * x^T[k]   (VPU only, dense vregs)
#   xt_ref: (F_IN, R, 128)   ot_ref: (F_OUT, R, 128)
# ---------------------------------------------------------------------------
def _grl_linear_kernel(xt_ref, w_ref, b_ref, ot_ref):
    # Hoist the 10 weight + 2 bias SMEM scalar reads above the MAC loops.
    w = [[w_ref[j, k] for k in range(F_IN)] for j in range(F_OUT)]
    b = [b_ref[j] for j in range(F_OUT)]
    # Load the five (R, 128) sublane/lane-dense slabs once; upcast the operand
    # for the f32 accumulator (no-op when the input is already f32, and keeps
    # v5e -- which has no bf16 VALU -- correct for bf16 inputs).
    x = [xt_ref[k].astype(jnp.float32) for k in range(F_IN)]
    for j in range(F_OUT):                       # unrolled: 2 output rows
        acc = w[j][0] * x[0]
        for k in range(1, F_IN):                 # unrolled: 4 more MACs per row
            acc = acc + w[j][k] * x[k]
        ot_ref[j] = (acc + b[j]).astype(ot_ref.dtype)   # bias added once


def _round_up(a, m):
    return (a + m - 1) // m * m


@partial(jax.jit, static_argnames=("lam",))
def domain_test_forward(x, weight, bias, *, lam=1.0):
    """x: (N, 5); weight: (2, 5); bias: (2,). Returns (N, 2) == x @ W.T + b."""
    if lam <= 0:
        raise Exception(
            "lam must be a positive number, the reversal is already built in "
            "the function"
        )

    # GRL: identity in forward, -lam * grad in backward.
    x = _grad_reverse(x, lam)
    # TODO(synk): the pallas_call below has no custom_vjp, so the linear layer
    # is forward/inference-only; training would also need a VJP for it.

    n, f_in = x.shape
    assert f_in == F_IN and weight.shape == (F_OUT, F_IN) and bias.shape == (F_OUT,)

    # --- tile selection: pad only to 128 lanes (+ <8 rows/step), never a tile.
    rows = pl.cdiv(n, _LANES)
    if rows <= _MAX_TILE_ROWS:
        num_steps = 1
        tile_rows = rows                       # block == full dim, no 8x pad needed
    else:
        num_steps = pl.cdiv(rows, _MAX_TILE_ROWS)
        if num_steps % 2:                      # v7x: even grid -> both TensorCores
            num_steps += 1
        tile_rows = _round_up(pl.cdiv(rows, num_steps), 8)
    rows_pad = num_steps * tile_rows
    n_pad = rows_pad * _LANES

    # Lane/sublane-dense layout: (F_IN, rows_pad, 128). The transpose/pad/
    # reshape glue fuses with the surrounding ops under jit.
    xt = jnp.pad(x.T, ((0, 0), (0, n_pad - n))).reshape(F_IN, rows_pad, _LANES)
    w32 = weight.astype(jnp.float32)
    b32 = bias.astype(jnp.float32)

    cost = pl.CostEstimate(
        flops=2 * F_IN * F_OUT * n_pad,
        transcendentals=0,
        bytes_accessed=(F_IN + F_OUT) * x.dtype.itemsize * n_pad,
    )

    out_t = pl.pallas_call(
        _grl_linear_kernel,
        out_shape=jax.ShapeDtypeStruct((F_OUT, rows_pad, _LANES), x.dtype),
        grid=(num_steps,),
        in_specs=[
            pl.BlockSpec((F_IN, tile_rows, _LANES), lambda i: (0, i, 0)),  # x^T
            pl.BlockSpec(memory_space=pltpu.MemorySpace.SMEM),             # W (2,5)
            pl.BlockSpec(memory_space=pltpu.MemorySpace.SMEM),             # b (2,)
        ],
        out_specs=pl.BlockSpec((F_OUT, tile_rows, _LANES), lambda i: (0, i, 0)),
        compiler_params=pltpu.CompilerParams(
            dimension_semantics=("parallel",),     # shard steps across v7x's 2 TCs
        ),
        cost_estimate=cost,
    )(xt, w32, b32)

    # Un-pad and return batch-major (N, 2); fuses into the output copy under jit.
    return out_t.reshape(F_OUT, n_pad)[:, :n].T


if __name__ == "__main__":
    key = jax.random.PRNGKey(0)
    k_x, k_w, k_b = jax.random.split(key, 3)

    # Linear(5, 2): weight (2, 5), bias (2,). Batch deliberately not a multiple
    # of 128 to exercise the padding / tail-slice path.
    batch = 200

    x = jax.random.normal(k_x, (batch, F_IN), dtype=jnp.float32)

    # Deterministic init mimicking PyTorch nn.Linear default: U(-1/sqrt(fan_in), +)
    bound = 1.0 / jnp.sqrt(jnp.float32(F_IN))
    weight = jax.random.uniform(
        k_w, (F_OUT, F_IN), minval=-bound, maxval=bound, dtype=jnp.float32
    )
    bias = jax.random.uniform(
        k_b, (F_OUT,), minval=-bound, maxval=bound, dtype=jnp.float32
    )

    out = domain_test_forward(x, weight, bias, lam=1.0)
    out = jax.block_until_ready(out)

    # Reference check in plain JAX (GRL is identity in forward).
    ref = x @ weight.T + bias
    assert out.shape == (batch, F_OUT)
    assert jnp.allclose(out, ref, atol=1e-5, rtol=1e-5)

    print("KERNEL_OK")
</pallas_src>

<mosaic_0001>
module attributes {stable_mosaic.version = 11 : i64} {
  func.func @_grl_linear_kernel(%arg0: i32, %arg1: memref<5x2x128xf32, #tpu.memory_space<vmem>>, %arg2: memref<2x5xf32, #tpu.memory_space<smem>>, %arg3: memref<2xf32, #tpu.memory_space<smem>>, %arg4: memref<2x2x128xf32, #tpu.memory_space<vmem>>) attributes {dimension_semantics = [#tpu.dimension_semantics<parallel>], iteration_bounds = array<i64: 1>, scalar_prefetch = 0 : i64, scratch_operands = 0 : i64, tpu.core_type = #tpu.core_type<tc>, window_params = [{transform_indices = @transform_0, window_bounds = array<i64: 5, 2, 128>}, {transform_indices = @transform_1, window_bounds = array<i64: 2, 5>}, {transform_indices = @transform_2, window_bounds = array<i64: 2>}, {transform_indices = @transform_3, window_bounds = array<i64: 2, 2, 128>}]} {
    %c0 = arith.constant 0 : index
    %c0_0 = arith.constant 0 : index
    %0 = memref.load %arg2[%c0, %c0_0] : memref<2x5xf32, #tpu.memory_space<smem>>
    %c0_1 = arith.constant 0 : index
    %c1 = arith.constant 1 : index
    %1 = memref.load %arg2[%c0_1, %c1] : memref<2x5xf32, #tpu.memory_space<smem>>
    %c0_2 = arith.constant 0 : index
    %c2 = arith.constant 2 : index
    %2 = memref.load %arg2[%c0_2, %c2] : memref<2x5xf32, #tpu.memory_space<smem>>
    %c0_3 = arith.constant 0 : index
    %c3 = arith.constant 3 : index
    %3 = memref.load %arg2[%c0_3, %c3] : memref<2x5xf32, #tpu.memory_space<smem>>
    %c0_4 = arith.constant 0 : index
    %c4 = arith.constant 4 : index
    %4 = memref.load %arg2[%c0_4, %c4] : memref<2x5xf32, #tpu.memory_space<smem>>
    %c1_5 = arith.constant 1 : index
    %c0_6 = arith.constant 0 : index
    %5 = memref.load %arg2[%c1_5, %c0_6] : memref<2x5xf32, #tpu.memory_space<smem>>
    %c1_7 = arith.constant 1 : index
    %c1_8 = arith.constant 1 : index
    %6 = memref.load %arg2[%c1_7, %c1_8] : memref<2x5xf32, #tpu.memory_space<smem>>
    %c1_9 = arith.constant 1 : index
    %c2_10 = arith.constant 2 : index
    %7 = memref.load %arg2[%c1_9, %c2_10] : memref<2x5xf32, #tpu.memory_space<smem>>
    %c1_11 = arith.constant 1 : index
    %c3_12 = arith.constant 3 : index
    %8 = memref.load %arg2[%c1_11, %c3_12] : memref<2x5xf32, #tpu.memory_space<smem>>
    %c1_13 = arith.constant 1 : index
    %c4_14 = arith.constant 4 : index
    %9 = memref.load %arg2[%c1_13, %c4_14] : memref<2x5xf32, #tpu.memory_space<smem>>
    %c0_15 = arith.constant 0 : index
    %10 = memref.load %arg3[%c0_15] : memref<2xf32, #tpu.memory_space<smem>>
    %c1_16 = arith.constant 1 : index
    %11 = memref.load %arg3[%c1_16] : memref<2xf32, #tpu.memory_space<smem>>
    %c0_17 = arith.constant 0 : index
    %c0_18 = arith.constant 0 : index
    %c0_19 = arith.constant 0 : index
    %12 = vector.load %arg1[%c0_17, %c0_18, %c0_19] : memref<5x2x128xf32, #tpu.memory_space<vmem>>, vector<1x2x128xf32>
    %13 = vector.shape_cast %12 : vector<1x2x128xf32> to vector<2x128xf32>
    %c1_20 = arith.constant 1 : index
    %c0_21 = arith.constant 0 : index
    %c0_22 = arith.constant 0 : index
    %14 = vector.load %arg1[%c1_20, %c0_21, %c0_22] : memref<5x2x128xf32, #tpu.memory_space<vmem>>, vector<1x2x128xf32>
    %15 = vector.shape_cast %14 : vector<1x2x128xf32> to vector<2x128xf32>
    %c2_23 = arith.constant 2 : index
    %c0_24 = arith.constant 0 : index
    %c0_25 = arith.constant 0 : index
    %16 = vector.load %arg1[%c2_23, %c0_24, %c0_25] : memref<5x2x128xf32, #tpu.memory_space<vmem>>, vector<1x2x128xf32>
    %17 = vector.shape_cast %16 : vector<1x2x128xf32> to vector<2x128xf32>
    %c3_26 = arith.constant 3 : index
    %c0_27 = arith.constant 0 : index
    %c0_28 = arith.constant 0 : index
    %18 = vector.load %arg1[%c3_26, %c0_27, %c0_28] : memref<5x2x128xf32, #tpu.memory_space<vmem>>, vector<1x2x128xf32>
    %19 = vector.shape_cast %18 : vector<1x2x128xf32> to vector<2x128xf32>
    %c4_29 = arith.constant 4 : index
    %c0_30 = arith.constant 0 : index
    %c0_31 = arith.constant 0 : index
    %20 = vector.load %arg1[%c4_29, %c0_30, %c0_31] : memref<5x2x128xf32, #tpu.memory_space<vmem>>, vector<1x2x128xf32>
    %21 = vector.shape_cast %20 : vector<1x2x128xf32> to vector<2x128xf32>
    %22 = vector.broadcast %0 : f32 to vector<2x128xf32>
    %23 = arith.mulf %22, %13 : vector<2x128xf32>
    %24 = vector.broadcast %1 : f32 to vector<2x128xf32>
    %25 = arith.mulf %24, %15 : vector<2x128xf32>
    %26 = arith.addf %23, %25 : vector<2x128xf32>
    %27 = vector.broadcast %2 : f32 to vector<2x128xf32>
    %28 = arith.mulf %27, %17 : vector<2x128xf32>
    %29 = arith.addf %26, %28 : vector<2x128xf32>
    %30 = vector.broadcast %3 : f32 to vector<2x128xf32>
    %31 = arith.mulf %30, %19 : vector<2x128xf32>
    %32 = arith.addf %29, %31 : vector<2x128xf32>
    %33 = vector.broadcast %4 : f32 to vector<2x128xf32>
    %34 = arith.mulf %33, %21 : vector<2x128xf32>
    %35 = arith.addf %32, %34 : vector<2x128xf32>
    %36 = vector.broadcast %10 : f32 to vector<2x128xf32>
    %37 = arith.addf %35, %36 : vector<2x128xf32>
    %c0_32 = arith.constant 0 : index
    %c0_33 = arith.constant 0 : index
    %c0_34 = arith.constant 0 : index
    %38 = vector.load %arg4[%c0_32, %c0_33, %c0_34] : memref<2x2x128xf32, #tpu.memory_space<vmem>>, vector<1x2x128xf32>
    %39 = vector.shape_cast %38 : vector<1x2x128xf32> to vector<2x128xf32>
    %40 = vector.shape_cast %37 : vector<2x128xf32> to vector<1x2x128xf32>
    tpu.vector_store %arg4[%c0_32, %c0_33, %c0_34], %40 {strides = array<i32>} : memref<2x2x128xf32, #tpu.memory_space<vmem>>, vector<1x2x128xf32>,
    %41 = vector.broadcast %5 : f32 to vector<2x128xf32>
    %42 = arith.mulf %41, %13 : vector<2x128xf32>
    %43 = vector.broadcast %6 : f32 to vector<2x128xf32>
    %44 = arith.mulf %43, %15 : vector<2x128xf32>
    %45 = arith.addf %42, %44 : vector<2x128xf32>
    %46 = vector.broadcast %7 : f32 to vector<2x128xf32>
    %47 = arith.mulf %46, %17 : vector<2x128xf32>
    %48 = arith.addf %45, %47 : vector<2x128xf32>
    %49 = vector.broadcast %8 : f32 to vector<2x128xf32>
    %50 = arith.mulf %49, %19 : vector<2x128xf32>
    %51 = arith.addf %48, %50 : vector<2x128xf32>
    %52 = vector.broadcast %9 : f32 to vector<2x128xf32>
    %53 = arith.mulf %52, %21 : vector<2x128xf32>
    %54 = arith.addf %51, %53 : vector<2x128xf32>
    %55 = vector.broadcast %11 : f32 to vector<2x128xf32>
    %56 = arith.addf %54, %55 : vector<2x128xf32>
    %c1_35 = arith.constant 1 : index
    %c0_36 = arith.constant 0 : index
    %c0_37 = arith.constant 0 : index
    %57 = vector.load %arg4[%c1_35, %c0_36, %c0_37] : memref<2x2x128xf32, #tpu.memory_space<vmem>>, vector<1x2x128xf32>
    %58 = vector.shape_cast %57 : vector<1x2x128xf32> to vector<2x128xf32>
    %59 = vector.shape_cast %56 : vector<2x128xf32> to vector<1x2x128xf32>
    tpu.vector_store %arg4[%c1_35, %c0_36, %c0_37], %59 {strides = array<i32>} : memref<2x2x128xf32, #tpu.memory_space<vmem>>, vector<1x2x128xf32>,
    return
  }
  func.func @transform_0(%arg0: i32) -> (i32, i32, i32) {
    %c0_i32 = arith.constant 0 : i32
    %c0_i32_0 = arith.constant 0 : i32
    %c0_i32_1 = arith.constant 0 : i32
    return %c0_i32, %arg0, %c0_i32_0 : i32, i32, i32
  }
  func.func @transform_1(%arg0: i32) -> (i32, i32) {
    %c0_i32 = arith.constant 0 : i32
    %c0_i32_0 = arith.constant 0 : i32
    %c0_i32_1 = arith.constant 0 : i32
    return %c0_i32, %c0_i32_0 : i32, i32
  }
  func.func @transform_2(%arg0: i32) -> i32 {
    %c0_i32 = arith.constant 0 : i32
    %c0_i32_0 = arith.constant 0 : i32
    return %c0_i32 : i32
  }
  func.func @transform_3(%arg0: i32) -> (i32, i32, i32) {
    %c0_i32 = arith.constant 0 : i32
    %c0_i32_0 = arith.constant 0 : i32
    %c0_i32_1 = arith.constant 0 : i32
    return %c0_i32, %arg0, %c0_i32_0 : i32, i32, i32
  }
}

</mosaic_0001>

<llo_original>
// kernel: domain_test_forward.1
$region0: #{domain_test_forward.1}
  #allocation0 [shape = 'u32[]', space=smem, size = 0x4, offset = 0x4, fixed_abs, tag = 'smem constant byte address 0x4 - core index']
  #allocation1 [shape = 'u32[72,128]{1,0:T(1,128)}', space=vmem, size = 0x9000, scoped, tag = 'internal scratch']
  %s0 = inlined_call_operand.vmem [shape: f32[5,2,128], index: 0, kind: input, shape index: {}]
  %s1 = inlined_call_operand.vmem [shape: f32[2,5], index: 1, kind: input, shape index: {}]
  %s2 = inlined_call_operand.vmem [shape: f32[2], index: 2, kind: input, shape index: {}]
  %s3 = inlined_call_operand.vmem [shape: f32[2,2,128], index: 3, kind: output, shape index: {}]
  %s4 = sld [smem:[#allocation0]]
  $region30: #{domain_test_forward.1} parent=0
    _
  %s6 = ssub.s32 1, %s4
  %s7 = scalar_select 0, %s6, %s4
  $region1: #{domain_test_forward.1} parent=0
    #allocation2 [shape = 'u8[1024]{0}', space=smem, size = 0x400, scoped, tag = 'input window, operand 1, single buffered']
    #allocation3 [shape = 's32[1]{0}', space=sflag, size = 0x4, scoped, tag = 'scoped memory for domain_test_forward.1']
    #allocation4 [shape = 'u8[512]{0}', space=smem, size = 0x200, scoped, tag = 'input window, operand 2, single buffered']
    #allocation5 [shape = 's32[1]{0}', space=sflag, size = 0x4, scoped, tag = 'scoped memory for domain_test_forward.1']
    %8 = vsyncpa [#allocation3], 0
    %9 = vsyncpa [#allocation5], 0
    // Predicated region
    $region2: #{domain_test_forward.1} parent=1 // pred_check
      _
    $region3: #{domain_test_forward.1} parent=1 // pred_check_branch
      %11 = sbr.rel (0) target = $region5
    $region4: #{domain_test_forward.1} parent=1 // pred_region
      _
    $region5: #{domain_test_forward.1} parent=1 // pred_fallthru
      _
    // Predicated region
    $region6: #{domain_test_forward.1} parent=1 // pred_check
      _
    $region7: #{domain_test_forward.1} parent=1 // pred_check_branch
      %13 = sbr.rel (0) target = $region9
    $region8: #{domain_test_forward.1} parent=1 // pred_region
      %15 = vsyncadd [#allocation3], 0
      %s17 = sshll.u32 %s1, 4
      %s18 = int_to_ptr.vmem [resolvable:$true] %s17
      %20 = dma.vmem_to_smem %s18, 32, [#allocation2], [#allocation3]
    $region9: #{domain_test_forward.1} parent=1 // pred_fallthru
      _
    // Predicated region
    $region10: #{domain_test_forward.1} parent=1 // pred_check
      _
    $region11: #{domain_test_forward.1} parent=1 // pred_check_branch
      %22 = sbr.rel (0) target = $region13
    $region12: #{domain_test_forward.1} parent=1 // pred_region
      %24 = vsyncadd [#allocation5], 0
      %s26 = sshll.u32 %s2, 4
      %s27 = int_to_ptr.vmem [resolvable:$true] %s26
      %29 = dma.vmem_to_smem %s27, 16, [#allocation4], [#allocation5]
    $region13: #{domain_test_forward.1} parent=1 // pred_fallthru
      _
    // Predicated region
    $region14: #{domain_test_forward.1} parent=1 // pred_check
      _
    $region15: #{domain_test_forward.1} parent=1 // pred_check_branch
      %31 = sbr.rel (0) target = $region17
    $region16: #{domain_test_forward.1} parent=1 // pred_region
      %33 = dma.done [#allocation3], 32
    $region17: #{domain_test_forward.1} parent=1 // pred_fallthru
      _
    // Predicated region
    $region18: #{domain_test_forward.1} parent=1 // pred_check
      _
    $region19: #{domain_test_forward.1} parent=1 // pred_check_branch
      %35 = sbr.rel (0) target = $region21
    $region20: #{domain_test_forward.1} parent=1 // pred_region
      %37 = dma.done [#allocation5], 16
    $region21: #{domain_test_forward.1} parent=1 // pred_fallthru
      _
    %38 = sfence
    %s39 = sld [smem:[#allocation2]]
    %s40 = sld [smem:[#allocation2 + $0x1]]
    %s41 = sld [smem:[#allocation2 + $0x2]]
    %s42 = sld [smem:[#allocation2 + $0x3]]
    %s43 = sld [smem:[#allocation2 + $0x4]]
    %s44 = sld [smem:[#allocation2 + $0x80]]
    %s45 = sld [smem:[#allocation2 + $0x81]]
    %s46 = sld [smem:[#allocation2 + $0x82]]
    %s47 = sld [smem:[#allocation2 + $0x83]]
    %s48 = sld [smem:[#allocation2 + $0x84]]
    %s49 = sld [smem:[#allocation4]]
    %s50 = sld [smem:[#allocation4 + $0x1]]
    %v51 = vld [vmem:[%s0] sm:$0x3]
    %s52 = scalar_lea.vmem %s0, 2
    %v53 = vld [vmem:[%s52] sm:$0x3]
    %s54 = scalar_lea.vmem %s0, 4
    %v55 = vld [vmem:[%s54] sm:$0x3]
    %s56 = scalar_lea.vmem %s0, 6
    %v57 = vld [vmem:[%s56] sm:$0x3]
    %s58 = scalar_lea.vmem %s0, 8
    %v59 = vld [vmem:[%s58] sm:$0x3]
    %v60 = vstv %s39
    %v61 = vmul.f32 %v60, %v51
    %v62 = vstv %s40
    %v63 = vmul.f32 %v62, %v53
    %v64 = vadd.f32 %v61, %v63
    %v65 = vstv %s41
    %v66 = vmul.f32 %v65, %v55
    %v67 = vadd.f32 %v64, %v66
    %v68 = vstv %s42
    %v69 = vmul.f32 %v68, %v57
    %v70 = vadd.f32 %v67, %v69
    %v71 = vstv %s43
    %v72 = vmul.f32 %v71, %v59
    %v73 = vadd.f32 %v70, %v72
    %v74 = vstv %s49
    %v75 = vadd.f32 %v73, %v74
    %76 = vst [vmem:[%s3] sm:$0x3] %v75
    %v77 = vstv %s44
    %v78 = vmul.f32 %v77, %v51
    %v79 = vstv %s45
    %v80 = vmul.f32 %v79, %v53
    %v81 = vadd.f32 %v78, %v80
    %v82 = vstv %s46
    %v83 = vmul.f32 %v82, %v55
    %v84 = vadd.f32 %v81, %v83
    %v85 = vstv %s47
    %v86 = vmul.f32 %v85, %v57
    %v87 = vadd.f32 %v84, %v86
    %v88 = vstv %s48
    %v89 = vmul.f32 %v88, %v59
    %v90 = vadd.f32 %v87, %v89
    %v91 = vstv %s50
    %v92 = vadd.f32 %v90, %v91
    %s93 = scalar_lea.vmem %s3, 2
    %94 = vst [vmem:[%s93] sm:$0x3] %v92
    // Predicated region
    $region22: #{domain_test_forward.1} parent=1 // pred_check
      _
    $region23: #{domain_test_forward.1} parent=1 // pred_check_branch
      %96 = sbr.rel (0) target = $region25
    $region24: #{domain_test_forward.1} parent=1 // pred_region
      _
    $region25: #{domain_test_forward.1} parent=1 // pred_fallthru
      _
    // Predicated region
    $region26: #{domain_test_forward.1} parent=1 // pred_check
      _
    $region27: #{domain_test_forward.1} parent=1 // pred_check_branch
      %98 = sbr.rel (0) target = $region29
    $region28: #{domain_test_forward.1} parent=1 // pred_region
      _
    $region29: #{domain_test_forward.1} parent=1 // pred_fallthru
      _
    %99 = vsyncpa [#allocation3], 1
    %100 = vsyncpa [#allocation5], 1

</llo_original>
